<compile_context>
chip_gen: v7x
topology: tpu7x:2x2x1
jax: 0.10.0
libtpu: 0.0.40
codegen_flags: <defaults>
</compile_context>

<pallas_src>
import jax
import jax.numpy as jnp
from jax import lax
from jax.experimental import pallas as pl
from jax.experimental.pallas import tpu as pltpu


# -----------------------------------------------------------------------------
# Kernel
# -----------------------------------------------------------------------------
def qnetwork_kernel(x_ref, a_ref, w1o_ref, w1a_ref, b1_ref, w2_ref, b2_ref,
                    w3_ref, b3_ref, o_ref):
    # fc1: split matmul replaces cat([obs, act], 1) @ w1 (no lane concat).
    # f32 inputs / f32 accumulation; K is 16 and 4, so this is MXU-cheap.
    h1 = (jnp.dot(x_ref[...], w1o_ref[...], preferred_element_type=jnp.float32)
          + jnp.dot(a_ref[...], w1a_ref[...], preferred_element_type=jnp.float32)
          + b1_ref[...])
    h1 = jnp.maximum(h1, 0.0)

    # fc2 (f32 MXU, f32 accumulation).  Padded lanes (120->128) stay zero.
    h2 = jnp.dot(h1, w2_ref[...], preferred_element_type=jnp.float32) + b2_ref[...]
    h2 = jnp.maximum(h2, 0.0)

    # fc3: w3_row [1,128] contracted against h2 [tb,128] on the last dims
    # (i.e. w3 @ h2^T on the MXU) -> lane-dense [1, tb] row, so the store is a
    # full-width vst instead of a masked 1-lane column store.
    q = lax.dot_general(
        w3_ref[...], h2,
        dimension_numbers=(((1,), (1,)), ((), ())),
        preferred_element_type=jnp.float32) + b3_ref[0]
    o_ref[...] = q.astype(o_ref.dtype)


# -----------------------------------------------------------------------------
# Wrapper
# -----------------------------------------------------------------------------
def _pick_tile(B, tile_b):
    """Pick a batch tile: big (few grid steps), multiple of 128 when tiled,
    divides B when possible (skips padding), and >=2 tiles for moderately
    large batches so v7x can use both TensorCores."""
    if B > tile_b:
        return tile_b
    if B >= 512 and B % 256 == 0:
        return B // 2          # 2 tiles, each a multiple of 128, no padding
    return B                   # single tile == full array dims (any B works)


def qnetwork_forward(x, a, packed_params, tile_b=1024):
    """x: [B, obs_dim] f32, a: [B, act_dim] f32 -> q: [B, 1] f32."""
    w1o, w1a, b1, w2, b2, w3, b3 = packed_params
    B, obs_dim = x.shape
    act_dim = a.shape[1]

    assert tile_b % 128 == 0, "tile_b must be a multiple of 128 lanes"
    tb = _pick_tile(B, tile_b)
    num_tiles = pl.cdiv(B, tb)
    Bp = num_tiles * tb

    xi, ai = x, a
    if Bp != B:
        # Rare path: only when B > tile_b and B isn't a multiple of tile_b.
        xi = jnp.pad(x, ((0, Bp - B), (0, 0)))
        ai = jnp.pad(a, ((0, Bp - B), (0, 0)))

    # Weights/biases stay resident in VMEM across the whole batch grid.
    resident = lambda s: pl.BlockSpec(s, lambda i: (0,) * len(s))

    q_row = pl.pallas_call(
        qnetwork_kernel,
        out_shape=jax.ShapeDtypeStruct((1, Bp), jnp.float32),
        grid=(num_tiles,),
        in_specs=[
            pl.BlockSpec((tb, obs_dim), lambda i: (i, 0)),   # obs tile (f32)
            pl.BlockSpec((tb, act_dim), lambda i: (i, 0)),   # act tile (f32)
            resident(w1o.shape), resident(w1a.shape), resident(b1.shape),
            resident(w2.shape), resident(b2.shape), resident(w3.shape),
            pl.BlockSpec(memory_space=pltpu.MemorySpace.SMEM),  # b3 scalar
        ],
        out_specs=pl.BlockSpec((1, tb), lambda i: (0, i)),   # lane-dense row
        compiler_params=pltpu.CompilerParams(
            dimension_semantics=("parallel",)),
    )(xi, ai, w1o, w1a, b1, w2, b2, w3, b3)

    return q_row[0, :B].reshape(B, 1)


# -----------------------------------------------------------------------------
# Param init / packing
# -----------------------------------------------------------------------------
def init_linear(key, in_f, out_f):
    """torch.nn.Linear-style init (uniform +/- 1/sqrt(in_f)); weight is [in, out]."""
    kw, kb = jax.random.split(key)
    bound = 1.0 / jnp.sqrt(jnp.float32(in_f))
    w = jax.random.uniform(kw, (in_f, out_f), jnp.float32, -bound, bound)
    b = jax.random.uniform(kb, (1, out_f), jnp.float32, -bound, bound)
    return w, b


def pack_qnet_params(params, obs_dim, h1_pad=128, h2_pad=128):
    """One-time packing: split fc1 into obs/act halves, zero-pad hidden dims to
    128 lanes, keep everything f32 (accuracy; kernel is not MXU-bound)."""
    w1, b1, w2, b2, w3, b3 = params

    def pad2(m, rows, cols):
        out = jnp.zeros((rows, cols), m.dtype)
        return out.at[:m.shape[0], :m.shape[1]].set(m)

    w1p = pad2(w1, w1.shape[0], h1_pad)       # [obs+act, 128]
    w1o = w1p[:obs_dim]                       # [obs_dim, 128] f32
    w1a = w1p[obs_dim:]                       # [act_dim, 128] f32
    b1p = pad2(b1, 1, h1_pad)                 # [1, 128] f32 (zeros in pad)

    w2p = pad2(w2, h1_pad, h2_pad)            # [128, 128] f32
    b2p = pad2(b2, 1, h2_pad)                 # [1, 128] f32

    w3row = pad2(w3.T, 1, h2_pad)             # [1, 128] f32 (fc3 as lane row)
    b3p = b3.reshape(1)                       # (1,) f32 scalar -> SMEM
    return (w1o, w1a, b1p, w2p, b2p, w3row, b3p)


# -----------------------------------------------------------------------------
# Self-check
# -----------------------------------------------------------------------------
def _ref_f32(x, a, params):
    """Full-precision reference matching the original PyTorch module."""
    # TODO(synk): preprocess_obs_fn is env-specific; assumed identity float cast.
    w1, b1, w2, b2, w3, b3 = params
    xa = jnp.concatenate([x, a], axis=1)
    h1 = jnp.maximum(xa @ w1 + b1, 0.0)
    h2 = jnp.maximum(h1 @ w2 + b2, 0.0)
    return h2 @ w3 + b3


if __name__ == "__main__":
    # Small shapes consistent with the module: obs dim = 16, action dim = 4.
    obs_dim, act_dim, batch = 16, 4, 8

    key = jax.random.PRNGKey(0)
    k_x, k_a, k1, k2, k3, k_big = jax.random.split(key, 6)

    x = jax.random.normal(k_x, (batch, obs_dim), jnp.float32)
    a = jax.random.normal(k_a, (batch, act_dim), jnp.float32)

    w1, b1 = init_linear(k1, obs_dim + act_dim, 120)
    w2, b2 = init_linear(k2, 120, 84)
    w3, b3 = init_linear(k3, 84, 1)
    params = (w1, b1, w2, b2, w3, b3)
    packed = pack_qnet_params(params, obs_dim)

    # --- small batch (single grid tile, block == full array dims) ---
    q = jax.block_until_ready(qnetwork_forward(x, a, packed))
    assert q.shape == (batch, 1)
    assert jnp.allclose(q, _ref_f32(x, a, params), atol=1e-3, rtol=1e-3)

    # --- larger batch: exercises the multi-tile grid, lane-dense output rows,
    #     and weight-resident specs (2048 rows -> 2 tiles of 1024, no padding).
    big_b = 2048
    kxb, kab = jax.random.split(k_big)
    xb = jax.random.normal(kxb, (big_b, obs_dim), jnp.float32)
    ab = jax.random.normal(kab, (big_b, act_dim), jnp.float32)
    qb = jax.block_until_ready(qnetwork_forward(xb, ab, packed, tile_b=1024))
    assert qb.shape == (big_b, 1)
    assert jnp.allclose(qb, _ref_f32(xb, ab, params), atol=1e-3, rtol=1e-3)

    print("KERNEL_OK")
</pallas_src>

<mosaic_0001>
module attributes {stable_mosaic.version = 11 : i64} {
  func.func @qnetwork_kernel(%arg0: i32, %arg1: memref<8x16xf32, #tpu.memory_space<vmem>>, %arg2: memref<8x4xf32, #tpu.memory_space<vmem>>, %arg3: memref<16x128xf32, #tpu.memory_space<vmem>>, %arg4: memref<4x128xf32, #tpu.memory_space<vmem>>, %arg5: memref<1x128xf32, #tpu.memory_space<vmem>>, %arg6: memref<128x128xf32, #tpu.memory_space<vmem>>, %arg7: memref<1x128xf32, #tpu.memory_space<vmem>>, %arg8: memref<1x128xf32, #tpu.memory_space<vmem>>, %arg9: memref<1xf32, #tpu.memory_space<smem>>, %arg10: memref<1x8xf32, #tpu.memory_space<vmem>>) attributes {dimension_semantics = [#tpu.dimension_semantics<parallel>], iteration_bounds = array<i64: 1>, scalar_prefetch = 0 : i64, scratch_operands = 0 : i64, tpu.core_type = #tpu.core_type<tc>, window_params = [{transform_indices = @transform_0, window_bounds = array<i64: 8, 16>}, {transform_indices = @transform_1, window_bounds = array<i64: 8, 4>}, {pipeline_mode = #tpu.pipeline_mode<synchronous>, transform_indices = @transform_2, window_bounds = array<i64: 16, 128>}, {pipeline_mode = #tpu.pipeline_mode<synchronous>, transform_indices = @transform_3, window_bounds = array<i64: 4, 128>}, {pipeline_mode = #tpu.pipeline_mode<synchronous>, transform_indices = @transform_4, window_bounds = array<i64: 1, 128>}, {pipeline_mode = #tpu.pipeline_mode<synchronous>, transform_indices = @transform_5, window_bounds = array<i64: 128, 128>}, {pipeline_mode = #tpu.pipeline_mode<synchronous>, transform_indices = @transform_6, window_bounds = array<i64: 1, 128>}, {pipeline_mode = #tpu.pipeline_mode<synchronous>, transform_indices = @transform_7, window_bounds = array<i64: 1, 128>}, {transform_indices = @transform_8, window_bounds = array<i64: 1>}, {transform_indices = @transform_9, window_bounds = array<i64: 1, 8>}]} {
    %c0 = arith.constant 0 : index
    %c0_0 = arith.constant 0 : index
    %0 = vector.load %arg1[%c0, %c0_0] : memref<8x16xf32, #tpu.memory_space<vmem>>, vector<8x16xf32>
    %c0_1 = arith.constant 0 : index
    %c0_2 = arith.constant 0 : index
    %1 = vector.load %arg3[%c0_1, %c0_2] : memref<16x128xf32, #tpu.memory_space<vmem>>, vector<16x128xf32>
    %cst = arith.constant dense<0.000000e+00> : vector<8x128xf32>
    %2 = tpu.matmul %0, %1, %cst {dimension_numbers = #tpu.dot_dimension_numbers<[1], [0], [0], [1], [0, 0, 1, 1], [], []>} : vector<8x16xf32>, vector<16x128xf32>, vector<8x128xf32> -> vector<8x128xf32>
    %c0_3 = arith.constant 0 : index
    %c0_4 = arith.constant 0 : index
    %3 = vector.load %arg2[%c0_3, %c0_4] : memref<8x4xf32, #tpu.memory_space<vmem>>, vector<8x4xf32>
    %c0_5 = arith.constant 0 : index
    %c0_6 = arith.constant 0 : index
    %4 = vector.load %arg4[%c0_5, %c0_6] : memref<4x128xf32, #tpu.memory_space<vmem>>, vector<4x128xf32>
    %cst_7 = arith.constant dense<0.000000e+00> : vector<8x128xf32>
    %5 = tpu.matmul %3, %4, %cst_7 {dimension_numbers = #tpu.dot_dimension_numbers<[1], [0], [0], [1], [0, 0, 1, 1], [], []>} : vector<8x4xf32>, vector<4x128xf32>, vector<8x128xf32> -> vector<8x128xf32>
    %6 = arith.addf %2, %5 : vector<8x128xf32>
    %c0_8 = arith.constant 0 : index
    %c0_9 = arith.constant 0 : index
    %7 = vector.load %arg5[%c0_8, %c0_9] : memref<1x128xf32, #tpu.memory_space<vmem>>, vector<1x128xf32>
    %8 = vector.broadcast %7 : vector<1x128xf32> to vector<8x128xf32>
    %9 = arith.addf %6, %8 : vector<8x128xf32>
    %cst_10 = arith.constant 0.000000e+00 : f32
    %10 = vector.broadcast %cst_10 : f32 to vector<8x128xf32>
    %11 = arith.maximumf %9, %10 : vector<8x128xf32>
    %c0_11 = arith.constant 0 : index
    %c0_12 = arith.constant 0 : index
    %12 = vector.load %arg6[%c0_11, %c0_12] : memref<128x128xf32, #tpu.memory_space<vmem>>, vector<128x128xf32>
    %cst_13 = arith.constant dense<0.000000e+00> : vector<8x128xf32>
    %13 = tpu.matmul %11, %12, %cst_13 {dimension_numbers = #tpu.dot_dimension_numbers<[1], [0], [0], [1], [0, 0, 1, 1], [], []>} : vector<8x128xf32>, vector<128x128xf32>, vector<8x128xf32> -> vector<8x128xf32>
    %c0_14 = arith.constant 0 : index
    %c0_15 = arith.constant 0 : index
    %14 = vector.load %arg7[%c0_14, %c0_15] : memref<1x128xf32, #tpu.memory_space<vmem>>, vector<1x128xf32>
    %15 = vector.broadcast %14 : vector<1x128xf32> to vector<8x128xf32>
    %16 = arith.addf %13, %15 : vector<8x128xf32>
    %cst_16 = arith.constant 0.000000e+00 : f32
    %17 = vector.broadcast %cst_16 : f32 to vector<8x128xf32>
    %18 = arith.maximumf %16, %17 : vector<8x128xf32>
    %c0_17 = arith.constant 0 : index
    %c0_18 = arith.constant 0 : index
    %19 = vector.load %arg8[%c0_17, %c0_18] : memref<1x128xf32, #tpu.memory_space<vmem>>, vector<1x128xf32>
    %cst_19 = arith.constant dense<0.000000e+00> : vector<1x8xf32>
    %20 = tpu.matmul %19, %18, %cst_19 {dimension_numbers = #tpu.dot_dimension_numbers<[1], [1], [0], [0], [0, 0, 1, 0], [], []>} : vector<1x128xf32>, vector<8x128xf32>, vector<1x8xf32> -> vector<1x8xf32>
    %c0_20 = arith.constant 0 : index
    %21 = memref.load %arg9[%c0_20] : memref<1xf32, #tpu.memory_space<smem>>
    %22 = vector.broadcast %21 : f32 to vector<1x8xf32>
    %23 = arith.addf %20, %22 : vector<1x8xf32>
    %c0_21 = arith.constant 0 : index
    %c0_22 = arith.constant 0 : index
    %24 = vector.load %arg10[%c0_21, %c0_22] : memref<1x8xf32, #tpu.memory_space<vmem>>, vector<1x8xf32>
    tpu.vector_store %arg10[%c0_21, %c0_22], %23 {strides = array<i32>} : memref<1x8xf32, #tpu.memory_space<vmem>>, vector<1x8xf32>,
    return
  }
  func.func @transform_0(%arg0: i32) -> (i32, i32) {
    %c0_i32 = arith.constant 0 : i32
    %c0_i32_0 = arith.constant 0 : i32
    return %arg0, %c0_i32 : i32, i32
  }
  func.func @transform_1(%arg0: i32) -> (i32, i32) {
    %c0_i32 = arith.constant 0 : i32
    %c0_i32_0 = arith.constant 0 : i32
    return %arg0, %c0_i32 : i32, i32
  }
  func.func @transform_2(%arg0: i32) -> (i32, i32) {
    %c0_i32 = arith.constant 0 : i32
    %c0_i32_0 = arith.constant 0 : i32
    %c0_i32_1 = arith.constant 0 : i32
    return %c0_i32, %c0_i32_0 : i32, i32
  }
  func.func @transform_3(%arg0: i32) -> (i32, i32) {
    %c0_i32 = arith.constant 0 : i32
    %c0_i32_0 = arith.constant 0 : i32
    %c0_i32_1 = arith.constant 0 : i32
    return %c0_i32, %c0_i32_0 : i32, i32
  }
  func.func @transform_4(%arg0: i32) -> (i32, i32) {
    %c0_i32 = arith.constant 0 : i32
    %c0_i32_0 = arith.constant 0 : i32
    %c0_i32_1 = arith.constant 0 : i32
    return %c0_i32, %c0_i32_0 : i32, i32
  }
  func.func @transform_5(%arg0: i32) -> (i32, i32) {
    %c0_i32 = arith.constant 0 : i32
    %c0_i32_0 = arith.constant 0 : i32
    %c0_i32_1 = arith.constant 0 : i32
    return %c0_i32, %c0_i32_0 : i32, i32
  }
  func.func @transform_6(%arg0: i32) -> (i32, i32) {
    %c0_i32 = arith.constant 0 : i32
    %c0_i32_0 = arith.constant 0 : i32
    %c0_i32_1 = arith.constant 0 : i32
    return %c0_i32, %c0_i32_0 : i32, i32
  }
  func.func @transform_7(%arg0: i32) -> (i32, i32) {
    %c0_i32 = arith.constant 0 : i32
    %c0_i32_0 = arith.constant 0 : i32
    %c0_i32_1 = arith.constant 0 : i32
    return %c0_i32, %c0_i32_0 : i32, i32
  }
  func.func @transform_8(%arg0: i32) -> i32 {
    %c0_i32 = arith.constant 0 : i32
    %c0_i32_0 = arith.constant 0 : i32
    return %c0_i32 : i32
  }
  func.func @transform_9(%arg0: i32) -> (i32, i32) {
    %c0_i32 = arith.constant 0 : i32
    %c0_i32_0 = arith.constant 0 : i32
    return %c0_i32, %arg0 : i32, i32
  }
}

</mosaic_0001>

<llo_original>
// kernel: tpu_custom_call.1
$region0: #{tpu_custom_call.1}
  #allocation0 [shape = 'u32[]', space=smem, size = 0x4, offset = 0x4, fixed_abs, tag = 'smem constant byte address 0x4 - core index']
  #allocation1 [shape = 'u32[144,128]{1,0:T(1,128)}', space=vmem, size = 0x12000, scoped, tag = 'internal scratch']
  #allocation2 [shape = 'f32[1]{0:T(128)S(6)}', space=smem, size = 0x200, scoped, tag = 'scoped memory for tpu_custom_call.1']
  %s0 = inlined_call_operand.hbm [shape: f32[8,16], index: 0, kind: input, shape index: {}]
  %s1 = inlined_call_operand.vmem [shape: f32[8,4], index: 1, kind: input, shape index: {}]
  %s2 = inlined_call_operand.vmem [shape: f32[16,128], index: 2, kind: input, shape index: {}]
  %s3 = inlined_call_operand.vmem [shape: f32[4,128], index: 3, kind: input, shape index: {}]
  %s4 = inlined_call_operand.vmem [shape: f32[1,128], index: 4, kind: input, shape index: {}]
  %s5 = inlined_call_operand.hbm [shape: f32[128,128], index: 5, kind: input, shape index: {}]
  %s6 = inlined_call_operand.vmem [shape: f32[1,128], index: 6, kind: input, shape index: {}]
  %s7 = inlined_call_operand.vmem [shape: f32[1,128], index: 7, kind: input, shape index: {}]
  %s8 = inlined_call_operand.<no memory space> [shape: f32[1], index: 8, kind: input, shape index: {}]
  %s9 = inlined_call_operand.hbm [shape: f32[1,8], index: 9, kind: output, shape index: {}]
  %s10 = sld [smem:[#allocation0]]
  $region54: #{tpu_custom_call.1} parent=0
    _
  %s12 = ssub.s32 1, %s10
  %s13 = scalar_select 0, %s12, %s10
  %14 = sst [smem:[#allocation2]] %s8
  $region1: #{tpu_custom_call.1} parent=0
    #allocation3 [shape = 'u8[4096]{0}', space=vmem, size = 0x1000, scoped, tag = 'input window, operand 0, single buffered']
    #allocation4 [shape = 's32[1]{0}', space=sflag, size = 0x4, scoped, tag = 'scoped memory for tpu_custom_call.1']
    #allocation5 [shape = 's32[1]{0}', space=sflag, size = 0x4, scoped, tag = 'scoped memory for tpu_custom_call.1']
    #allocation6 [shape = 'u8[65536]{0}', space=vmem, size = 0x10000, scoped, tag = 'input window, operand 5, single buffered']
    #allocation7 [shape = 's32[1]{0}', space=sflag, size = 0x4, scoped, tag = 'scoped memory for tpu_custom_call.1']
    #allocation8 [shape = 'u8[512]{0}', space=vmem, size = 0x400, scoped, tag = 'output window, operand 0, single buffered']
    %15 = vsyncpa [#allocation4], 0
    %16 = vsyncpa [#allocation7], 0
    %17 = vsyncpa [#allocation5], 0
    // Predicated region
    $region2: #{tpu_custom_call.1} parent=1 // pred_check
      _
    $region3: #{tpu_custom_call.1} parent=1 // pred_check_branch
      %19 = sbr.rel (0) target = $region5
    $region4: #{tpu_custom_call.1} parent=1 // pred_region
      %s21 = ssub.s32 128, 128
      %22 = vsyncadd [#allocation4], %s21
      %s24 = sshll.u32 [#allocation3], 4
      %s25 = int_to_ptr.vmem [resolvable:$true] %s24
      %27 = dma.hbm_to_vmem [thread:$0]  %s0, 128, %s25, [#allocation4]
    $region5: #{tpu_custom_call.1} parent=1 // pred_fallthru
      _
    // Predicated region
    $region6: #{tpu_custom_call.1} parent=1 // pred_check
      _
    $region7: #{tpu_custom_call.1} parent=1 // pred_check_branch
      %29 = sbr.rel (0) target = $region9
    $region8: #{tpu_custom_call.1} parent=1 // pred_region
      _
    $region9: #{tpu_custom_call.1} parent=1 // pred_fallthru
      _
    // Predicated region
    $region10: #{tpu_custom_call.1} parent=1 // pred_check
      _
    $region11: #{tpu_custom_call.1} parent=1 // pred_check_branch
      %31 = sbr.rel (0) target = $region13
    $region12: #{tpu_custom_call.1} parent=1 // pred_region
      _
    $region13: #{tpu_custom_call.1} parent=1 // pred_fallthru
      _
    // Predicated region
    $region14: #{tpu_custom_call.1} parent=1 // pred_check
      _
    $region15: #{tpu_custom_call.1} parent=1 // pred_check_branch
      %33 = sbr.rel (0) target = $region17
    $region16: #{tpu_custom_call.1} parent=1 // pred_region
      _
    $region17: #{tpu_custom_call.1} parent=1 // pred_fallthru
      _
    // Predicated region
    $region18: #{tpu_custom_call.1} parent=1 // pred_check
      _
    $region19: #{tpu_custom_call.1} parent=1 // pred_check_branch
      %35 = sbr.rel (0) target = $region21
    $region20: #{tpu_custom_call.1} parent=1 // pred_region
      _
    $region21: #{tpu_custom_call.1} parent=1 // pred_fallthru
      _
    // Predicated region
    $region22: #{tpu_custom_call.1} parent=1 // pred_check
      _
    $region23: #{tpu_custom_call.1} parent=1 // pred_check_branch
      %37 = sbr.rel (0) target = $region25
    $region24: #{tpu_custom_call.1} parent=1 // pred_region
      %s39 = ssub.s32 2048, 2048
      %40 = vsyncadd [#allocation7], %s39
      %s41 = sshll.u32 [#allocation6], 4
      %s42 = int_to_ptr.vmem [resolvable:$true] %s41
      %47 = dma.hbm_to_vmem [thread:$0]  %s5, 2048, %s42, [#allocation7], 128, 128, 8
    $region25: #{tpu_custom_call.1} parent=1 // pred_fallthru
      _
    // Predicated region
    $region26: #{tpu_custom_call.1} parent=1 // pred_check
      _
    $region27: #{tpu_custom_call.1} parent=1 // pred_check_branch
      %49 = sbr.rel (0) target = $region29
    $region28: #{tpu_custom_call.1} parent=1 // pred_region
      _
    $region29: #{tpu_custom_call.1} parent=1 // pred_fallthru
      _
    // Predicated region
    $region30: #{tpu_custom_call.1} parent=1 // pred_check
      _
    $region31: #{tpu_custom_call.1} parent=1 // pred_check_branch
      %51 = sbr.rel (0) target = $region33
    $region32: #{tpu_custom_call.1} parent=1 // pred_region
      _
    $region33: #{tpu_custom_call.1} parent=1 // pred_fallthru
      _
    // Predicated region
    $region34: #{tpu_custom_call.1} parent=1 // pred_check
      _
    $region35: #{tpu_custom_call.1} parent=1 // pred_check_branch
      %53 = sbr.rel (0) target = $region37
    $region36: #{tpu_custom_call.1} parent=1 // pred_region
      _
    $region37: #{tpu_custom_call.1} parent=1 // pred_fallthru
      _
    // Predicated region
    $region38: #{tpu_custom_call.1} parent=1 // pred_check
      _
    $region39: #{tpu_custom_call.1} parent=1 // pred_check_branch
      %55 = sbr.rel (0) target = $region41
    $region40: #{tpu_custom_call.1} parent=1 // pred_region
      %56 = dma.done [#allocation4], 128
    $region41: #{tpu_custom_call.1} parent=1 // pred_fallthru
      _
    // Predicated region
    $region42: #{tpu_custom_call.1} parent=1 // pred_check
      _
    $region43: #{tpu_custom_call.1} parent=1 // pred_check_branch
      %58 = sbr.rel (0) target = $region45
    $region44: #{tpu_custom_call.1} parent=1 // pred_region
      %59 = dma.done [#allocation7], 2048
    $region45: #{tpu_custom_call.1} parent=1 // pred_fallthru
      _
    %v60 = vld [vmem:[#allocation3] sm:$0xff]
    %v61 = vld [vmem:[%s2] sm:$0xff]
    %v62 = vld [vmem:[%s2 + $0x8] sm:$0xff]
    %v63 = vld [vmem:[%s1] sm:$0xff]
    %v64 = vld [vmem:[%s3] sm:$0xf]
    %vm65 = vcmask 31744
    %v67 = vsel %vm65, %v63, 0
    %vm69 = vcmask 1043456
    %v71 = vsel %vm69, %v64, 0
    %73 = vmatprep.subr.mxu0 0.0
    %74 = vmatpush1.msra.mxu0 %v71
    %75 = vmatprep.subr.mxu0 0.0
    %76 = vmatpush1.msra.mxu0 0.0
    %77 = vmatprep.subr.mxu0 0.0
    %78 = vmatpush1.msra.mxu0 0.0
    %79 = vmatprep.subr.mxu0 0.0
    %80 = vmatpush1.msra.mxu0 0.0
    %81 = vmatprep.subr.mxu0 0.0
    %82 = vmatpush1.msra.mxu0 0.0
    %83 = vmatprep.subr.mxu0 0.0
    %84 = vmatpush1.msra.mxu0 0.0
    %85 = vmatprep.subr.mxu0 0.0
    %86 = vmatpush1.msra.mxu0 0.0
    %87 = vmatprep.subr.mxu0 0.0
    %88 = vmatpush1.msra.mxu0 0.0
    %89 = vmatprep.subr.mxu0 0.0
    %90 = vmatpush1.msra.mxu0 0.0
    %91 = vmatprep.subr.mxu0 0.0
    %92 = vmatpush1.msra.mxu0 0.0
    %93 = vmatprep.subr.mxu0 0.0
    %94 = vmatpush1.msra.mxu0 0.0
    %95 = vmatprep.subr.mxu0 0.0
    %96 = vmatpush1.msra.mxu0 0.0
    %97 = vmatprep.subr.mxu0 0.0
    %98 = vmatpush1.msra.mxu0 0.0
    %99 = vmatprep.subr.mxu0 0.0
    %100 = vmatpush1.msra.mxu0 0.0
    %101 = vmatprep.subr.mxu0 0.0
    %102 = vmatpush1.msra.mxu0 0.0
    %103 = vmatprep.subr.mxu0 0.0
    %104 = vmatpush1.msra.mxu0 0.0
    %105 = vmatprep.subr.mxu0 0.0
    %106 = vmatpush1.msra.mxu0 0.0
    %107 = vmatprep.subr.mxu0 0.0
    %108 = vmatpush1.msra.mxu0 0.0
    %109 = vmatprep.subr.mxu0 0.0
    %110 = vmatpush1.msra.mxu0 0.0
    %111 = vmatprep.subr.mxu0 0.0
    %112 = vmatpush1.msra.mxu0 0.0
    %113 = vmatprep.subr.mxu0 0.0
    %114 = vmatpush1.msra.mxu0 0.0
    %115 = vmatprep.subr.mxu0 0.0
    %116 = vmatpush1.msra.mxu0 0.0
    %117 = vmatprep.subr.mxu0 0.0
    %118 = vmatpush1.msra.mxu0 0.0
    %119 = vmatprep.subr.mxu0 0.0
    %120 = vmatpush1.msra.mxu0 0.0
    %121 = vmatprep.subr.mxu0 0.0
    %122 = vmatpush1.msra.mxu0 0.0
    %123 = vmatprep.subr.mxu0 0.0
    %124 = vmatpush1.msra.mxu0 0.0
    %125 = vmatprep.subr.mxu0 0.0
    %126 = vmatpush1.msra.mxu0 0.0
    %127 = vmatprep.subr.mxu0 0.0
    %128 = vmatpush1.msra.mxu0 0.0
    %129 = vmatprep.subr.mxu0 0.0
    %130 = vmatpush1.msra.mxu0 0.0
    %131 = vmatprep.subr.mxu0 0.0
    %132 = vmatpush1.msra.mxu0 0.0
    %133 = vmatprep.subr.mxu0 0.0
    %134 = vmatpush1.msra.mxu0 0.0
    %135 = vmatprep.subr.mxu0 0.0
    %136 = vmatpush1.msra.mxu0 0.0
    %137 = vmatprep.mubr.f32.mxu0 0.0
    %138 = vmatmul.mubr.f32.gmra.mrb[0].mxu0 %v67
    %v139 = vpop.f32.mrb[0].mxu0
    %v140 = vadd.f32 0.0, %v139
    %v141 = vpop.f32.mrb[0].mxu0
    %142 = vdwg.mxu0
    %vm143 = vcmask 130048
    %v145 = vsel %vm143, %v60, 0
    %147 = vmatprep.subr.mxu0 0.0
    %148 = vmatpush1.msra.mxu0 %v61
    %149 = vmatprep.subr.mxu0 0.0
    %150 = vmatpush1.msra.mxu0 %v62
    %151 = vmatprep.subr.mxu0 0.0
    %152 = vmatpush1.msra.mxu0 0.0
    %153 = vmatprep.subr.mxu0 0.0
    %154 = vmatpush1.msra.mxu0 0.0
    %155 = vmatprep.subr.mxu0 0.0
    %156 = vmatpush1.msra.mxu0 0.0
    %157 = vmatprep.subr.mxu0 0.0
    %158 = vmatpush1.msra.mxu0 0.0
    %159 = vmatprep.subr.mxu0 0.0
    %160 = vmatpush1.msra.mxu0 0.0
    %161 = vmatprep.subr.mxu0 0.0
    %162 = vmatpush1.msra.mxu0 0.0
    %163 = vmatprep.subr.mxu0 0.0
    %164 = vmatpush1.msra.mxu0 0.0
    %165 = vmatprep.subr.mxu0 0.0
    %166 = vmatpush1.msra.mxu0 0.0
    %167 = vmatprep.subr.mxu0 0.0
    %168 = vmatpush1.msra.mxu0 0.0
    %169 = vmatprep.subr.mxu0 0.0
    %170 = vmatpush1.msra.mxu0 0.0
    %171 = vmatprep.subr.mxu0 0.0
    %172 = vmatpush1.msra.mxu0 0.0
    %173 = vmatprep.subr.mxu0 0.0
    %174 = vmatpush1.msra.mxu0 0.0
    %175 = vmatprep.subr.mxu0 0.0
    %176 = vmatpush1.msra.mxu0 0.0
    %177 = vmatprep.subr.mxu0 0.0
    %178 = vmatpush1.msra.mxu0 0.0
    %179 = vmatprep.subr.mxu0 0.0
    %180 = vmatpush1.msra.mxu0 0.0
    %181 = vmatprep.subr.mxu0 0.0
    %182 = vmatpush1.msra.mxu0 0.0
    %183 = vmatprep.subr.mxu0 0.0
    %184 = vmatpush1.msra.mxu0 0.0
    %185 = vmatprep.subr.mxu0 0.0
    %186 = vmatpush1.msra.mxu0 0.0
    %187 = vmatprep.subr.mxu0 0.0
    %188 = vmatpush1.msra.mxu0 0.0
    %189 = vmatprep.subr.mxu0 0.0
    %190 = vmatpush1.msra.mxu0 0.0
    %191 = vmatprep.subr.mxu0 0.0
    %192 = vmatpush1.msra.mxu0 0.0
    %193 = vmatprep.subr.mxu0 0.0
    %194 = vmatpush1.msra.mxu0 0.0
    %195 = vmatprep.subr.mxu0 0.0
    %196 = vmatpush1.msra.mxu0 0.0
    %197 = vmatprep.subr.mxu0 0.0
    %198 = vmatpush1.msra.mxu0 0.0
    %199 = vmatprep.subr.mxu0 0.0
    %200 = vmatpush1.msra.mxu0 0.0
    %201 = vmatprep.subr.mxu0 0.0
    %202 = vmatpush1.msra.mxu0 0.0
    %203 = vmatprep.subr.mxu0 0.0
    %204 = vmatpush1.msra.mxu0 0.0
    %205 = vmatprep.subr.mxu0 0.0
    %206 = vmatpush1.msra.mxu0 0.0
    %207 = vmatprep.subr.mxu0 0.0
    %208 = vmatpush1.msra.mxu0 0.0
    %209 = vmatprep.subr.mxu0 0.0
    %210 = vmatpush1.msra.mxu0 0.0
    %211 = vmatprep.mubr.f32.mxu0 0.0
    %212 = vmatmul.mubr.f32.gmra.mrb[0].mxu0 %v145
    %v213 = vpop.f32.mrb[0].mxu0
    %v214 = vadd.f32 %v140, %v213
    %v215 = vpop.f32.mrb[0].mxu0
    %216 = vdwg.mxu0
    %v217 = vld [vmem:[%s4] sm:$0x1]
    %v219 = vlaneseq
    %v220 = vshrl.u32 %v219, 7
    %v221 = vsub.s32 0, %v220
    %v222 = vrot.slane %v217, %v221
    %v224 = vadd.f32 %v214, %v222
    %v225 = vmax.f32 %v224, 0.0
    %v226 = vld [vmem:[#allocation6] sm:$0xff]
    %v227 = vld [vmem:[#allocation6 + $0x8] sm:$0xff]
    %v228 = vld [vmem:[#allocation6 + $0x10] sm:$0xff]
    %v229 = vld [vmem:[#allocation6 + $0x18] sm:$0xff]
    %v230 = vld [vmem:[#allocation6 + $0x20] sm:$0xff]
    %v231 = vld [vmem:[#allocation6 + $0x28] sm:$0xff]
    %v232 = vld [vmem:[#allocation6 + $0x30] sm:$0xff]
    %v233 = vld [vmem:[#allocation6 + $0x38] sm:$0xff]
    %v234 = vld [vmem:[#allocation6 + $0x40] sm:$0xff]
    %v235 = vld [vmem:[#allocation6 + $0x48] sm:$0xff]
    %v236 = vld [vmem:[#allocation6 + $0x50] sm:$0xff]
    %v237 = vld [vmem:[#allocation6 + $0x58] sm:$0xff]
    %v238 = vld [vmem:[#allocation6 + $0x60] sm:$0xff]
    %v239 = vld [vmem:[#allocation6 + $0x68] sm:$0xff]
    %v240 = vld [vmem:[#allocation6 + $0x70] sm:$0xff]
    %v241 = vld [vmem:[#allocation6 + $0x78] sm:$0xff]
    %v242 = vld [vmem:[%s6] sm:$0x1]
    %v244 = vlaneseq
    %v245 = vshrl.u32 %v244, 7
    %v246 = vsub.s32 0, %v245
    %v247 = vrot.slane %v242, %v246
    %249 = vmatprep.subr.mxu0 0.0
    %250 = vmatpush1.msra.mxu0 %v226
    %251 = vmatprep.subr.mxu0 0.0
    %252 = vmatpush1.msra.mxu0 %v227
    %253 = vmatprep.subr.mxu0 0.0
    %254 = vmatpush1.msra.mxu0 %v228
    %255 = vmatprep.subr.mxu0 0.0
    %256 = vmatpush1.msra.mxu0 %v229
    %257 = vmatprep.subr.mxu0 0.0
    %258 = vmatpush1.msra.mxu0 %v230
    %259 = vmatprep.subr.mxu0 0.0
    %260 = vmatpush1.msra.mxu0 %v231
    %261 = vmatprep.subr.mxu0 0.0
    %262 = vmatpush1.msra.mxu0 %v232
    %263 = vmatprep.subr.mxu0 0.0
    %264 = vmatpush1.msra.mxu0 %v233
    %265 = vmatprep.subr.mxu0 0.0
    %266 = vmatpush1.msra.mxu0 %v234
    %267 = vmatprep.subr.mxu0 0.0
    %268 = vmatpush1.msra.mxu0 %v235
    %269 = vmatprep.subr.mxu0 0.0
    %270 = vmatpush1.msra.mxu0 %v236
    %271 = vmatprep.subr.mxu0 0.0
    %272 = vmatpush1.msra.mxu0 %v237
    %273 = vmatprep.subr.mxu0 0.0
    %274 = vmatpush1.msra.mxu0 %v238
    %275 = vmatprep.subr.mxu0 0.0
    %276 = vmatpush1.msra.mxu0 %v239
    %277 = vmatprep.subr.mxu0 0.0
    %278 = vmatpush1.msra.mxu0 %v240
    %279 = vmatprep.subr.mxu0 0.0
    %280 = vmatpush1.msra.mxu0 %v241
    %281 = vmatprep.subr.mxu0 0.0
    %282 = vmatpush1.msra.mxu0 0.0
    %283 = vmatprep.subr.mxu0 0.0
    %284 = vmatpush1.msra.mxu0 0.0
    %285 = vmatprep.subr.mxu0 0.0
    %286 = vmatpush1.msra.mxu0 0.0
    %287 = vmatprep.subr.mxu0 0.0
    %288 = vmatpush1.msra.mxu0 0.0
    %289 = vmatprep.subr.mxu0 0.0
    %290 = vmatpush1.msra.mxu0 0.0
    %291 = vmatprep.subr.mxu0 0.0
    %292 = vmatpush1.msra.mxu0 0.0
    %293 = vmatprep.subr.mxu0 0.0
    %294 = vmatpush1.msra.mxu0 0.0
    %295 = vmatprep.subr.mxu0 0.0
    %296 = vmatpush1.msra.mxu0 0.0
    %297 = vmatprep.subr.mxu0 0.0
    %298 = vmatpush1.msra.mxu0 0.0
    %299 = vmatprep.subr.mxu0 0.0
    %300 = vmatpush1.msra.mxu0 0.0
    %301 = vmatprep.subr.mxu0 0.0
    %302 = vmatpush1.msra.mxu0 0.0
    %303 = vmatprep.subr.mxu0 0.0
    %304 = vmatpush1.msra.mxu0 0.0
    %305 = vmatprep.subr.mxu0 0.0
    %306 = vmatpush1.msra.mxu0 0.0
    %307 = vmatprep.subr.mxu0 0.0
    %308 = vmatpush1.msra.mxu0 0.0
    %309 = vmatprep.subr.mxu0 0.0
    %310 = vmatpush1.msra.mxu0 0.0
    %311 = vmatprep.subr.mxu0 0.0
    %312 = vmatpush1.msra.mxu0 0.0
    %313 = vmatprep.mubr.f32.mxu0 0.0
    %314 = vmatmul.mubr.f32.gmra.mrb[0].mxu0 %v225
    %v315 = vpop.f32.mrb[0].mxu0
    %v316 = vadd.f32 %v247, %v315
    %v317 = vpop.f32.mrb[0].mxu0
    %318 = vdwg.mxu0
    %v319 = vmax.f32 %v316, 0.0
    %v320 = vld [vmem:[%s7] sm:$0x1]
    %s321 = sld [smem:[#allocation2]]
    %v322 = vstv %s321
    %323 = vmatprep.subr.mxu0 0.0
    %324 = vmatpush1.xpose.msra.mxu0 %v319
    %325 = vmatprep.subr.mxu0 0.0
    %326 = vmatpush1.xpose.msra.mxu0 0.0
    %327 = vmatprep.subr.mxu0 0.0
    %328 = vmatpush1.xpose.msra.mxu0 0.0
    %329 = vmatprep.subr.mxu0 0.0
    %330 = vmatpush1.xpose.msra.mxu0 0.0
    %331 = vmatprep.subr.mxu0 0.0
    %332 = vmatpush1.xpose.msra.mxu0 0.0
    %333 = vmatprep.subr.mxu0 0.0
    %334 = vmatpush1.xpose.msra.mxu0 0.0
    %335 = vmatprep.subr.mxu0 0.0
    %336 = vmatpush1.xpose.msra.mxu0 0.0
    %337 = vmatprep.subr.mxu0 0.0
    %338 = vmatpush1.xpose.msra.mxu0 0.0
    %339 = vmatprep.subr.mxu0 0.0
    %340 = vmatpush1.xpose.msra.mxu0 0.0
    %341 = vmatprep.subr.mxu0 0.0
    %342 = vmatpush1.xpose.msra.mxu0 0.0
    %343 = vmatprep.subr.mxu0 0.0
    %344 = vmatpush1.xpose.msra.mxu0 0.0
    %345 = vmatprep.subr.mxu0 0.0
    %346 = vmatpush1.xpose.msra.mxu0 0.0
    %347 = vmatprep.subr.mxu0 0.0
    %348 = vmatpush1.xpose.msra.mxu0 0.0
    %349 = vmatprep.subr.mxu0 0.0
    %350 = vmatpush1.xpose.msra.mxu0 0.0
    %351 = vmatprep.subr.mxu0 0.0
    %352 = vmatpush1.xpose.msra.mxu0 0.0
    %353 = vmatprep.subr.mxu0 0.0
    %354 = vmatpush1.xpose.msra.mxu0 0.0
    %355 = vmatprep.subr.mxu0 0.0
    %356 = vmatpush1.xpose.msra.mxu0 0.0
    %357 = vmatprep.subr.mxu0 0.0
    %358 = vmatpush1.xpose.msra.mxu0 0.0
    %359 = vmatprep.subr.mxu0 0.0
    %360 = vmatpush1.xpose.msra.mxu0 0.0
    %361 = vmatprep.subr.mxu0 0.0
    %362 = vmatpush1.xpose.msra.mxu0 0.0
    %363 = vmatprep.subr.mxu0 0.0
    %364 = vmatpush1.xpose.msra.mxu0 0.0
    %365 = vmatprep.subr.mxu0 0.0
    %366 = vmatpush1.xpose.msra.mxu0 0.0
    %367 = vmatprep.subr.mxu0 0.0
    %368 = vmatpush1.xpose.msra.mxu0 0.0
    %369 = vmatprep.subr.mxu0 0.0
    %370 = vmatpush1.xpose.msra.mxu0 0.0
    %371 = vmatprep.subr.mxu0 0.0
    %372 = vmatpush1.xpose.msra.mxu0 0.0
    %373 = vmatprep.subr.mxu0 0.0
    %374 = vmatpush1.xpose.msra.mxu0 0.0
    %375 = vmatprep.subr.mxu0 0.0
    %376 = vmatpush1.xpose.msra.mxu0 0.0
    %377 = vmatprep.subr.mxu0 0.0
    %378 = vmatpush1.xpose.msra.mxu0 0.0
    %379 = vmatprep.subr.mxu0 0.0
    %380 = vmatpush1.xpose.msra.mxu0 0.0
    %381 = vmatprep.subr.mxu0 0.0
    %382 = vmatpush1.xpose.msra.mxu0 0.0
    %383 = vmatprep.subr.mxu0 0.0
    %384 = vmatpush1.xpose.msra.mxu0 0.0
    %385 = vmatprep.subr.mxu0 0.0
    %386 = vmatpush1.xpose.msra.mxu0 0.0
    %387 = vmatprep.mubr.f32.mxu0 0.0
    %388 = vmatmul.mubr.f32.gmra.mrb[0].mxu0 %v320
    %v389 = vpop.f32.mrb[0].mxu0
    %v390 = vadd.f32 %v322, %v389
    %v391 = vpop.f32.mrb[0].mxu0
    %392 = vdwg.mxu0
    %vm393 = vcmask 57344
    %394 = vst.msk [vmem:[#allocation8] sm:$0x1] %vm393, %v390
    // Predicated region
    $region46: #{tpu_custom_call.1} parent=1 // pred_check
      _
    $region47: #{tpu_custom_call.1} parent=1 // pred_check_branch
      %396 = sbr.rel (0) target = $region49
    $region48: #{tpu_custom_call.1} parent=1 // pred_region
      %s398 = ssub.s32 16, 16
      %399 = vsyncadd [#allocation5], %s398
      %s401 = sshll.u32 [#allocation8], 4
      %s402 = int_to_ptr.vmem [resolvable:$true] %s401
      %404 = dma.vmem_to_hbm [thread:$0]  %s402, 16, %s9, [#allocation5]
    $region49: #{tpu_custom_call.1} parent=1 // pred_fallthru
      _
    // Predicated region
    $region50: #{tpu_custom_call.1} parent=1 // pred_check
      _
    $region51: #{tpu_custom_call.1} parent=1 // pred_check_branch
      %406 = sbr.rel (0) target = $region53
    $region52: #{tpu_custom_call.1} parent=1 // pred_region
      %407 = dma.done [#allocation5], 16
    $region53: #{tpu_custom_call.1} parent=1 // pred_fallthru
      _
    %408 = vsyncpa [#allocation4], 1
    %409 = vsyncpa [#allocation7], 1
    %410 = vsyncpa [#allocation5], 1

</llo_original>
